<compile_context>
chip_gen: v5e
topology: v5e:2x2
jax: 0.10.0
libtpu: 0.0.40
codegen_flags: <defaults>
</compile_context>

<pallas_src>
import functools

import jax
import jax.numpy as jnp
from jax.experimental import pallas as pl
from jax.experimental.pallas import tpu as pltpu

_LANE = 128


def _round_up(x, m):
    return ((x + m - 1) // m) * m


def _sublane(dtype):
    # Sublane quantum for the second-to-last dim by element width.
    return {4: 8, 2: 16, 1: 32}[jnp.dtype(dtype).itemsize]


def actor_kernel(x_ref, w1_ref, b1_ref, w2_ref, b2_ref, mu_ref):
    # First affine on the MXU with f32 accumulation; bias add + tanh in f32
    # (tanh goes to the EUP; f32 elementwise also avoids bf16 VPU work on v5e).
    h = jnp.dot(x_ref[...], w1_ref[...], preferred_element_type=jnp.float32)
    h = jnp.tanh(h + b1_ref[...])                          # [TB, H_pad], f32
    # Action head: cast back to the operand dtype so the bf16 MXU path is used
    # when requested (no-op for the default f32 operands).
    mu = jnp.dot(h.astype(w2_ref.dtype), w2_ref[...],
                 preferred_element_type=jnp.float32)
    mu_ref[...] = (mu + b2_ref[...]).astype(mu_ref.dtype)  # [TB, A_pad]


def prepare_actor_params(w1, b1, w2, b2, compute_dtype=jnp.float32):
    """Pad/cast params once. w1:[S,H] b1:[1,H] w2:[H,A] b2:[1,A] -> padded."""
    cd = jnp.dtype(compute_dtype)
    S, H = w1.shape
    A = w2.shape[1]
    H_pad = _round_up(H, _LANE)
    A_pad = _round_up(A, _LANE)
    # Zero padding is exact: padded hidden columns see b1=0 -> tanh(0)=0 and
    # hit zero rows of w2, so they contribute nothing to mu.
    w1p = jnp.zeros((S, H_pad), cd).at[:, :H].set(w1.astype(cd))
    b1p = jnp.zeros((1, H_pad), jnp.float32).at[:, :H].set(
        b1.astype(jnp.float32).reshape(1, H))
    w2p = jnp.zeros((H_pad, A_pad), cd).at[:H, :A].set(w2.astype(cd))
    b2p = jnp.zeros((1, A_pad), jnp.float32).at[:, :A].set(
        b2.astype(jnp.float32).reshape(1, A))
    return w1p, b1p, w2p, b2p


@functools.partial(
    jax.jit,
    static_argnames=("action_dim", "block_b", "compute_dtype", "return_padded"))
def actor_forward(x, w1p, b1p, w2p, b2p, *, action_dim, block_b=2048,
                  compute_dtype=jnp.float32, return_padded=False):
    """x: [B, S]; padded params from prepare_actor_params -> mu: [B, A] (f32)."""
    B, S = x.shape
    H_pad = w1p.shape[1]
    A_pad = w2p.shape[1]
    cd = jnp.dtype(compute_dtype)
    sub = _sublane(cd)

    # Batch tiling: sublane-rounded, single grid step unless B exceeds block_b.
    B_sub = _round_up(B, sub)
    if B_sub <= block_b:
        TB = B_sub
        B_pad = B_sub
    else:
        TB = _round_up(min(block_b, B_sub), sub)
        B_pad = _round_up(B, TB)

    xb = x if x.dtype == cd else x.astype(cd)
    if B_pad != B:
        xp = jnp.zeros((B_pad, S), cd).at[:B, :].set(xb)
    else:
        xp = xb

    grid = (B_pad // TB,)
    mu_pad = pl.pallas_call(
        actor_kernel,
        out_shape=jax.ShapeDtypeStruct((B_pad, A_pad), jnp.float32),
        grid_spec=pltpu.PrefetchScalarGridSpec(
            num_scalar_prefetch=0,
            grid=grid,
            in_specs=[
                # x: batch-tiled, last dim S unpadded (== full array dim).
                pl.BlockSpec((TB, S), lambda i: (i, 0)),
                # Weights / biases: constant block index -> VMEM-resident,
                # DMA'd once; default double-buffering on x/mu is enough.
                pl.BlockSpec((S, H_pad), lambda i: (0, 0)),
                pl.BlockSpec((1, H_pad), lambda i: (0, 0)),
                pl.BlockSpec((H_pad, A_pad), lambda i: (0, 0)),
                pl.BlockSpec((1, A_pad), lambda i: (0, 0)),
            ],
            out_specs=pl.BlockSpec((TB, A_pad), lambda i: (i, 0)),
        ),
        compiler_params=pltpu.CompilerParams(
            dimension_semantics=("parallel",),
        ),
    )(xp, w1p, b1p, w2p, b2p)

    if return_padded:
        return mu_pad            # [B_pad, A_pad] lane-dense slab
    if B_pad == B:
        return mu_pad[:, :action_dim]
    return mu_pad[:B, :action_dim]


def init_actor_params(key, state_dim, hidden_dim, action_dim):
    """Deterministic init mimicking nn.Linear defaults (U[-1/sqrt(fan_in), +])."""
    k1, k2, k3, k4 = jax.random.split(key, 4)
    bound1 = 1.0 / jnp.sqrt(jnp.float32(state_dim))
    bound2 = 1.0 / jnp.sqrt(jnp.float32(hidden_dim))
    # Stored transposed relative to PyTorch ([out, in] -> [in, out]).
    w1 = jax.random.uniform(k1, (state_dim, hidden_dim), jnp.float32, -bound1, bound1)
    b1 = jax.random.uniform(k2, (1, hidden_dim), jnp.float32, -bound1, bound1)
    w2 = jax.random.uniform(k3, (hidden_dim, action_dim), jnp.float32, -bound2, bound2)
    b2 = jax.random.uniform(k4, (1, action_dim), jnp.float32, -bound2, bound2)
    # Match Actor.__init__: action_head.weight *= 0.1, action_head.bias *= 0.0
    w2 = w2 * 0.1
    b2 = b2 * 0.0
    return w1, b1, w2, b2


def actor_ref(x, w1, b1, w2, b2):
    h = jnp.tanh(x @ w1 + b1)
    return h @ w2 + b2


if __name__ == "__main__":
    key = jax.random.PRNGKey(0)
    k_params, k_x = jax.random.split(key)

    state_dim, hidden_dim, action_dim = 16, 32, 8
    w1, b1, w2, b2 = init_actor_params(k_params, state_dim, hidden_dim, action_dim)

    # --- f32 path, single grid step (the common case) ---------------------
    batch = 512
    x = jax.random.normal(k_x, (batch, state_dim), jnp.float32)
    mu_ref = actor_ref(x, w1, b1, w2, b2)

    params_f32 = prepare_actor_params(w1, b1, w2, b2, compute_dtype=jnp.float32)
    mu = actor_forward(x, *params_f32, action_dim=action_dim,
                       compute_dtype=jnp.float32)
    jax.block_until_ready(mu)
    assert mu.shape == (batch, action_dim)
    assert jnp.allclose(mu, mu_ref, atol=1e-5, rtol=1e-5)

    # --- f32 path, multi-step grid + sublane batch padding -----------------
    batch2 = 600  # pads to 768 at TB=256 (3 grid steps)
    x2 = jax.random.normal(jax.random.PRNGKey(1), (batch2, state_dim), jnp.float32)
    mu2_ref = actor_ref(x2, w1, b1, w2, b2)
    mu2 = actor_forward(x2, *params_f32, action_dim=action_dim,
                        block_b=256, compute_dtype=jnp.float32)
    jax.block_until_ready(mu2)
    assert mu2.shape == (batch2, action_dim)
    assert jnp.allclose(mu2, mu2_ref, atol=1e-5, rtol=1e-5)

    # --- bf16 operand path (opt-in, v6e/v7x MXU fast path) ------------------
    params_bf16 = prepare_actor_params(w1, b1, w2, b2, compute_dtype=jnp.bfloat16)
    mu_bf16 = actor_forward(x, *params_bf16, action_dim=action_dim,
                            compute_dtype=jnp.bfloat16)
    jax.block_until_ready(mu_bf16)
    assert mu_bf16.shape == (batch, action_dim)
    assert jnp.allclose(mu_bf16, mu_ref, atol=3e-2, rtol=3e-2)

    print("KERNEL_OK")
</pallas_src>

<mosaic_0001>
module attributes {stable_mosaic.version = 11 : i64} {
  func.func @actor_kernel(%arg0: i32, %arg1: memref<512x16xf32, #tpu.memory_space<vmem>>, %arg2: memref<16x128xf32, #tpu.memory_space<vmem>>, %arg3: memref<1x128xf32, #tpu.memory_space<vmem>>, %arg4: memref<128x128xf32, #tpu.memory_space<vmem>>, %arg5: memref<1x128xf32, #tpu.memory_space<vmem>>, %arg6: memref<512x128xf32, #tpu.memory_space<vmem>>) attributes {dimension_semantics = [#tpu.dimension_semantics<parallel>], iteration_bounds = array<i64: 1>, scalar_prefetch = 0 : i64, scratch_operands = 0 : i64, tpu.core_type = #tpu.core_type<tc>, window_params = [{transform_indices = @transform_0, window_bounds = array<i64: 512, 16>}, {pipeline_mode = #tpu.pipeline_mode<synchronous>, transform_indices = @transform_1, window_bounds = array<i64: 16, 128>}, {pipeline_mode = #tpu.pipeline_mode<synchronous>, transform_indices = @transform_2, window_bounds = array<i64: 1, 128>}, {pipeline_mode = #tpu.pipeline_mode<synchronous>, transform_indices = @transform_3, window_bounds = array<i64: 128, 128>}, {pipeline_mode = #tpu.pipeline_mode<synchronous>, transform_indices = @transform_4, window_bounds = array<i64: 1, 128>}, {transform_indices = @transform_5, window_bounds = array<i64: 512, 128>}]} {
    %c0 = arith.constant 0 : index
    %c0_0 = arith.constant 0 : index
    %0 = vector.load %arg1[%c0, %c0_0] : memref<512x16xf32, #tpu.memory_space<vmem>>, vector<512x16xf32>
    %c0_1 = arith.constant 0 : index
    %c0_2 = arith.constant 0 : index
    %1 = vector.load %arg2[%c0_1, %c0_2] : memref<16x128xf32, #tpu.memory_space<vmem>>, vector<16x128xf32>
    %cst = arith.constant dense<0.000000e+00> : vector<512x128xf32>
    %2 = tpu.matmul %0, %1, %cst {dimension_numbers = #tpu.dot_dimension_numbers<[1], [0], [0], [1], [0, 0, 1, 1], [], []>} : vector<512x16xf32>, vector<16x128xf32>, vector<512x128xf32> -> vector<512x128xf32>
    %c0_3 = arith.constant 0 : index
    %c0_4 = arith.constant 0 : index
    %3 = vector.load %arg3[%c0_3, %c0_4] : memref<1x128xf32, #tpu.memory_space<vmem>>, vector<1x128xf32>
    %4 = vector.broadcast %3 : vector<1x128xf32> to vector<512x128xf32>
    %5 = arith.addf %2, %4 : vector<512x128xf32>
    %6 = math.tanh %5 : vector<512x128xf32>
    %c0_5 = arith.constant 0 : index
    %c0_6 = arith.constant 0 : index
    %7 = vector.load %arg4[%c0_5, %c0_6] : memref<128x128xf32, #tpu.memory_space<vmem>>, vector<128x128xf32>
    %cst_7 = arith.constant dense<0.000000e+00> : vector<512x128xf32>
    %8 = tpu.matmul %6, %7, %cst_7 {dimension_numbers = #tpu.dot_dimension_numbers<[1], [0], [0], [1], [0, 0, 1, 1], [], []>} : vector<512x128xf32>, vector<128x128xf32>, vector<512x128xf32> -> vector<512x128xf32>
    %c0_8 = arith.constant 0 : index
    %c0_9 = arith.constant 0 : index
    %9 = vector.load %arg5[%c0_8, %c0_9] : memref<1x128xf32, #tpu.memory_space<vmem>>, vector<1x128xf32>
    %10 = vector.broadcast %9 : vector<1x128xf32> to vector<512x128xf32>
    %11 = arith.addf %8, %10 : vector<512x128xf32>
    %c0_10 = arith.constant 0 : index
    %c0_11 = arith.constant 0 : index
    %12 = vector.load %arg6[%c0_10, %c0_11] : memref<512x128xf32, #tpu.memory_space<vmem>>, vector<512x128xf32>
    tpu.vector_store %arg6[%c0_10, %c0_11], %11 {strides = array<i32>} : memref<512x128xf32, #tpu.memory_space<vmem>>, vector<512x128xf32>,
    return
  }
  func.func @transform_0(%arg0: i32) -> (i32, i32) {
    %c0_i32 = arith.constant 0 : i32
    %c0_i32_0 = arith.constant 0 : i32
    return %arg0, %c0_i32 : i32, i32
  }
  func.func @transform_1(%arg0: i32) -> (i32, i32) {
    %c0_i32 = arith.constant 0 : i32
    %c0_i32_0 = arith.constant 0 : i32
    %c0_i32_1 = arith.constant 0 : i32
    return %c0_i32, %c0_i32_0 : i32, i32
  }
  func.func @transform_2(%arg0: i32) -> (i32, i32) {
    %c0_i32 = arith.constant 0 : i32
    %c0_i32_0 = arith.constant 0 : i32
    %c0_i32_1 = arith.constant 0 : i32
    return %c0_i32, %c0_i32_0 : i32, i32
  }
  func.func @transform_3(%arg0: i32) -> (i32, i32) {
    %c0_i32 = arith.constant 0 : i32
    %c0_i32_0 = arith.constant 0 : i32
    %c0_i32_1 = arith.constant 0 : i32
    return %c0_i32, %c0_i32_0 : i32, i32
  }
  func.func @transform_4(%arg0: i32) -> (i32, i32) {
    %c0_i32 = arith.constant 0 : i32
    %c0_i32_0 = arith.constant 0 : i32
    %c0_i32_1 = arith.constant 0 : i32
    return %c0_i32, %c0_i32_0 : i32, i32
  }
  func.func @transform_5(%arg0: i32) -> (i32, i32) {
    %c0_i32 = arith.constant 0 : i32
    %c0_i32_0 = arith.constant 0 : i32
    return %arg0, %c0_i32 : i32, i32
  }
}

</mosaic_0001>

<llo_original>
// kernel: actor_forward.1
$region0: #{actor_forward.1}
  #allocation0 [shape = 'u32[]', space=smem, size = 0x4, offset = 0x4, fixed_abs, tag = 'smem constant byte address 0x4 - core index']
  #allocation1 [shape = 'u32[72,128]{1,0:T(1,128)}', space=vmem, size = 0x9000, scoped, tag = 'internal scratch']
  %s0 = inlined_call_operand.vmem [shape: f32[512,16], index: 0, kind: input, shape index: {}]
  %s1 = inlined_call_operand.vmem [shape: f32[16,128], index: 1, kind: input, shape index: {}]
  %s2 = inlined_call_operand.vmem [shape: f32[1,128], index: 2, kind: input, shape index: {}]
  %s3 = inlined_call_operand.vmem [shape: f32[128,128], index: 3, kind: input, shape index: {}]
  %s4 = inlined_call_operand.vmem [shape: f32[1,128], index: 4, kind: input, shape index: {}]
  %s5 = inlined_call_operand.vmem [shape: f32[512,128], index: 5, kind: output, shape index: {}]
  %s6 = sld [smem:[#allocation0]]
  $region30: #{actor_forward.1} parent=0
    _
  %s8 = ssub.s32 1, %s6
  %s9 = scalar_select 0, %s8, %s6
  // Predicated region
  $region2: #{actor_forward.1} parent=0 // pred_check
    _
  $region3: #{actor_forward.1} parent=0 // pred_check_branch
    %11 = sbr.rel (0) target = $region5
  $region4: #{actor_forward.1} parent=0 // pred_region
    _
  $region5: #{actor_forward.1} parent=0 // pred_fallthru
    _
  // Predicated region
  $region6: #{actor_forward.1} parent=0 // pred_check
    _
  $region7: #{actor_forward.1} parent=0 // pred_check_branch
    %13 = sbr.rel (0) target = $region9
  $region8: #{actor_forward.1} parent=0 // pred_region
    _
  $region9: #{actor_forward.1} parent=0 // pred_fallthru
    _
  // Predicated region
  $region10: #{actor_forward.1} parent=0 // pred_check
    _
  $region11: #{actor_forward.1} parent=0 // pred_check_branch
    %15 = sbr.rel (0) target = $region13
  $region12: #{actor_forward.1} parent=0 // pred_region
    _
  $region13: #{actor_forward.1} parent=0 // pred_fallthru
    _
  // Predicated region
  $region14: #{actor_forward.1} parent=0 // pred_check
    _
  $region15: #{actor_forward.1} parent=0 // pred_check_branch
    %17 = sbr.rel (0) target = $region17
  $region16: #{actor_forward.1} parent=0 // pred_region
    _
  $region17: #{actor_forward.1} parent=0 // pred_fallthru
    _
  // Predicated region
  $region18: #{actor_forward.1} parent=0 // pred_check
    _
  $region19: #{actor_forward.1} parent=0 // pred_check_branch
    %19 = sbr.rel (0) target = $region21
  $region20: #{actor_forward.1} parent=0 // pred_region
    _
  $region21: #{actor_forward.1} parent=0 // pred_fallthru
    _
  %v20 = vld [vmem:[%s0] sm:$0xff]
  %v21 = vld [vmem:[%s0 + $0x8] sm:$0xff]
  %v22 = vld [vmem:[%s0 + $0x10] sm:$0xff]
  %v23 = vld [vmem:[%s0 + $0x18] sm:$0xff]
  %v24 = vld [vmem:[%s0 + $0x20] sm:$0xff]
  %v25 = vld [vmem:[%s0 + $0x28] sm:$0xff]
  %v26 = vld [vmem:[%s0 + $0x30] sm:$0xff]
  %v27 = vld [vmem:[%s0 + $0x38] sm:$0xff]
  %v28 = vld [vmem:[%s0 + $0x40] sm:$0xff]
  %v29 = vld [vmem:[%s0 + $0x48] sm:$0xff]
  %v30 = vld [vmem:[%s0 + $0x50] sm:$0xff]
  %v31 = vld [vmem:[%s0 + $0x58] sm:$0xff]
  %v32 = vld [vmem:[%s0 + $0x60] sm:$0xff]
  %v33 = vld [vmem:[%s0 + $0x68] sm:$0xff]
  %v34 = vld [vmem:[%s0 + $0x70] sm:$0xff]
  %v35 = vld [vmem:[%s0 + $0x78] sm:$0xff]
  %v36 = vld [vmem:[%s0 + $0x80] sm:$0xff]
  %v37 = vld [vmem:[%s0 + $0x88] sm:$0xff]
  %v38 = vld [vmem:[%s0 + $0x90] sm:$0xff]
  %v39 = vld [vmem:[%s0 + $0x98] sm:$0xff]
  %v40 = vld [vmem:[%s0 + $0xa0] sm:$0xff]
  %v41 = vld [vmem:[%s0 + $0xa8] sm:$0xff]
  %v42 = vld [vmem:[%s0 + $0xb0] sm:$0xff]
  %v43 = vld [vmem:[%s0 + $0xb8] sm:$0xff]
  %v44 = vld [vmem:[%s0 + $0xc0] sm:$0xff]
  %v45 = vld [vmem:[%s0 + $0xc8] sm:$0xff]
  %v46 = vld [vmem:[%s0 + $0xd0] sm:$0xff]
  %v47 = vld [vmem:[%s0 + $0xd8] sm:$0xff]
  %v48 = vld [vmem:[%s0 + $0xe0] sm:$0xff]
  %v49 = vld [vmem:[%s0 + $0xe8] sm:$0xff]
  %v50 = vld [vmem:[%s0 + $0xf0] sm:$0xff]
  %v51 = vld [vmem:[%s0 + $0xf8] sm:$0xff]
  %v52 = vld [vmem:[%s0 + $0x100] sm:$0xff]
  %v53 = vld [vmem:[%s0 + $0x108] sm:$0xff]
  %v54 = vld [vmem:[%s0 + $0x110] sm:$0xff]
  %v55 = vld [vmem:[%s0 + $0x118] sm:$0xff]
  %v56 = vld [vmem:[%s0 + $0x120] sm:$0xff]
  %v57 = vld [vmem:[%s0 + $0x128] sm:$0xff]
  %v58 = vld [vmem:[%s0 + $0x130] sm:$0xff]
  %v59 = vld [vmem:[%s0 + $0x138] sm:$0xff]
  %v60 = vld [vmem:[%s0 + $0x140] sm:$0xff]
  %v61 = vld [vmem:[%s0 + $0x148] sm:$0xff]
  %v62 = vld [vmem:[%s0 + $0x150] sm:$0xff]
  %v63 = vld [vmem:[%s0 + $0x158] sm:$0xff]
  %v64 = vld [vmem:[%s0 + $0x160] sm:$0xff]
  %v65 = vld [vmem:[%s0 + $0x168] sm:$0xff]
  %v66 = vld [vmem:[%s0 + $0x170] sm:$0xff]
  %v67 = vld [vmem:[%s0 + $0x178] sm:$0xff]
  %v68 = vld [vmem:[%s0 + $0x180] sm:$0xff]
  %v69 = vld [vmem:[%s0 + $0x188] sm:$0xff]
  %v70 = vld [vmem:[%s0 + $0x190] sm:$0xff]
  %v71 = vld [vmem:[%s0 + $0x198] sm:$0xff]
  %v72 = vld [vmem:[%s0 + $0x1a0] sm:$0xff]
  %v73 = vld [vmem:[%s0 + $0x1a8] sm:$0xff]
  %v74 = vld [vmem:[%s0 + $0x1b0] sm:$0xff]
  %v75 = vld [vmem:[%s0 + $0x1b8] sm:$0xff]
  %v76 = vld [vmem:[%s0 + $0x1c0] sm:$0xff]
  %v77 = vld [vmem:[%s0 + $0x1c8] sm:$0xff]
  %v78 = vld [vmem:[%s0 + $0x1d0] sm:$0xff]
  %v79 = vld [vmem:[%s0 + $0x1d8] sm:$0xff]
  %v80 = vld [vmem:[%s0 + $0x1e0] sm:$0xff]
  %v81 = vld [vmem:[%s0 + $0x1e8] sm:$0xff]
  %v82 = vld [vmem:[%s0 + $0x1f0] sm:$0xff]
  %v83 = vld [vmem:[%s0 + $0x1f8] sm:$0xff]
  %v84 = vld [vmem:[%s1] sm:$0xff]
  %v85 = vld [vmem:[%s1 + $0x8] sm:$0xff]
  %v86 = vld [vmem:[%s2] sm:$0x1]
  %v88 = vperm.slane %v86, 0
  %vm90 = vcmask 130048
  %v92 = vsel %vm90, %v20, 0
  %v95 = vsel %vm90, %v21, 0
  %v98 = vsel %vm90, %v22, 0
  %v101 = vsel %vm90, %v23, 0
  %v104 = vsel %vm90, %v24, 0
  %v107 = vsel %vm90, %v25, 0
  %v110 = vsel %vm90, %v26, 0
  %v113 = vsel %vm90, %v27, 0
  %v116 = vsel %vm90, %v28, 0
  %v119 = vsel %vm90, %v29, 0
  %v122 = vsel %vm90, %v30, 0
  %v125 = vsel %vm90, %v31, 0
  %v128 = vsel %vm90, %v32, 0
  %v131 = vsel %vm90, %v33, 0
  %v134 = vsel %vm90, %v34, 0
  %v137 = vsel %vm90, %v35, 0
  %v140 = vsel %vm90, %v36, 0
  %v143 = vsel %vm90, %v37, 0
  %v146 = vsel %vm90, %v38, 0
  %v149 = vsel %vm90, %v39, 0
  %v152 = vsel %vm90, %v40, 0
  %v155 = vsel %vm90, %v41, 0
  %v158 = vsel %vm90, %v42, 0
  %v161 = vsel %vm90, %v43, 0
  %v164 = vsel %vm90, %v44, 0
  %v167 = vsel %vm90, %v45, 0
  %v170 = vsel %vm90, %v46, 0
  %v173 = vsel %vm90, %v47, 0
  %v176 = vsel %vm90, %v48, 0
  %v179 = vsel %vm90, %v49, 0
  %v182 = vsel %vm90, %v50, 0
  %v185 = vsel %vm90, %v51, 0
  %v188 = vsel %vm90, %v52, 0
  %v191 = vsel %vm90, %v53, 0
  %v194 = vsel %vm90, %v54, 0
  %v197 = vsel %vm90, %v55, 0
  %v200 = vsel %vm90, %v56, 0
  %v203 = vsel %vm90, %v57, 0
  %v206 = vsel %vm90, %v58, 0
  %v209 = vsel %vm90, %v59, 0
  %v212 = vsel %vm90, %v60, 0
  %v215 = vsel %vm90, %v61, 0
  %v218 = vsel %vm90, %v62, 0
  %v221 = vsel %vm90, %v63, 0
  %v224 = vsel %vm90, %v64, 0
  %v227 = vsel %vm90, %v65, 0
  %v230 = vsel %vm90, %v66, 0
  %v233 = vsel %vm90, %v67, 0
  %v236 = vsel %vm90, %v68, 0
  %v239 = vsel %vm90, %v69, 0
  %v242 = vsel %vm90, %v70, 0
  %v245 = vsel %vm90, %v71, 0
  %v248 = vsel %vm90, %v72, 0
  %v251 = vsel %vm90, %v73, 0
  %v254 = vsel %vm90, %v74, 0
  %v257 = vsel %vm90, %v75, 0
  %v260 = vsel %vm90, %v76, 0
  %v263 = vsel %vm90, %v77, 0
  %v266 = vsel %vm90, %v78, 0
  %v269 = vsel %vm90, %v79, 0
  %v272 = vsel %vm90, %v80, 0
  %v275 = vsel %vm90, %v81, 0
  %v278 = vsel %vm90, %v82, 0
  %v281 = vsel %vm90, %v83, 0
  %283 = vmatpush.msra.mxu0 0.0
  %284 = vmatpush.msra.mxu0 0.0
  %285 = vmatpush.msra.mxu0 0.0
  %286 = vmatpush.msra.mxu0 0.0
  %287 = vmatpush.msra.mxu0 0.0
  %288 = vmatpush.msra.mxu0 0.0
  %289 = vmatpush.msra.mxu0 0.0
  %290 = vmatpush.msra.mxu0 0.0
  %291 = vmatpush.msra.mxu0 0.0
  %292 = vmatpush.msra.mxu0 0.0
  %293 = vmatpush.msra.mxu0 0.0
  %294 = vmatpush.msra.mxu0 0.0
  %295 = vmatpush.msra.mxu0 0.0
  %296 = vmatpush.msra.mxu0 0.0
  %297 = vmatpush.msra.mxu0 %v85
  %298 = vmatpush.msra.mxu0 %v84
  %299 = vmatmul.f32.gmra.mxu0 %v92
  %v300 = vpop.f32.mrf.mxu0
  %v301 = vadd.f32 %v88, %v300
  %302 = vmatmul.f32.gmra.mxu0 %v95
  %v303 = vpop.f32.mrf.mxu0
  %v304 = vadd.f32 %v88, %v303
  %305 = vmatmul.f32.gmra.mxu0 %v98
  %v306 = vpop.f32.mrf.mxu0
  %v307 = vadd.f32 %v88, %v306
  %308 = vmatmul.f32.gmra.mxu0 %v101
  %v309 = vpop.f32.mrf.mxu0
  %v310 = vadd.f32 %v88, %v309
  %311 = vmatmul.f32.gmra.mxu0 %v104
  %v312 = vpop.f32.mrf.mxu0
  %v313 = vadd.f32 %v88, %v312
  %314 = vmatmul.f32.gmra.mxu0 %v107
  %v315 = vpop.f32.mrf.mxu0
  %v316 = vadd.f32 %v88, %v315
  %317 = vmatmul.f32.gmra.mxu0 %v110
  %v318 = vpop.f32.mrf.mxu0
  %v319 = vadd.f32 %v88, %v318
  %320 = vmatmul.f32.gmra.mxu0 %v113
  %v321 = vpop.f32.mrf.mxu0
  %v322 = vadd.f32 %v88, %v321
  %323 = vmatmul.f32.gmra.mxu0 %v116
  %v324 = vpop.f32.mrf.mxu0
  %v325 = vadd.f32 %v88, %v324
  %326 = vmatmul.f32.gmra.mxu0 %v119
  %v327 = vpop.f32.mrf.mxu0
  %v328 = vadd.f32 %v88, %v327
  %329 = vmatmul.f32.gmra.mxu0 %v122
  %v330 = vpop.f32.mrf.mxu0
  %v331 = vadd.f32 %v88, %v330
  %332 = vmatmul.f32.gmra.mxu0 %v125
  %v333 = vpop.f32.mrf.mxu0
  %v334 = vadd.f32 %v88, %v333
  %335 = vmatmul.f32.gmra.mxu0 %v128
  %v336 = vpop.f32.mrf.mxu0
  %v337 = vadd.f32 %v88, %v336
  %338 = vmatmul.f32.gmra.mxu0 %v131
  %v339 = vpop.f32.mrf.mxu0
  %v340 = vadd.f32 %v88, %v339
  %341 = vmatmul.f32.gmra.mxu0 %v134
  %v342 = vpop.f32.mrf.mxu0
  %v343 = vadd.f32 %v88, %v342
  %344 = vmatmul.f32.gmra.mxu0 %v137
  %v345 = vpop.f32.mrf.mxu0
  %v346 = vadd.f32 %v88, %v345
  %347 = vmatmul.f32.gmra.mxu0 %v140
  %v348 = vpop.f32.mrf.mxu0
  %v349 = vadd.f32 %v88, %v348
  %350 = vmatmul.f32.gmra.mxu0 %v143
  %v351 = vpop.f32.mrf.mxu0
  %v352 = vadd.f32 %v88, %v351
  %353 = vmatmul.f32.gmra.mxu0 %v146
  %v354 = vpop.f32.mrf.mxu0
  %v355 = vadd.f32 %v88, %v354
  %356 = vmatmul.f32.gmra.mxu0 %v149
  %v357 = vpop.f32.mrf.mxu0
  %v358 = vadd.f32 %v88, %v357
  %359 = vmatmul.f32.gmra.mxu0 %v152
  %v360 = vpop.f32.mrf.mxu0
  %v361 = vadd.f32 %v88, %v360
  %362 = vmatmul.f32.gmra.mxu0 %v155
  %v363 = vpop.f32.mrf.mxu0
  %v364 = vadd.f32 %v88, %v363
  %365 = vmatmul.f32.gmra.mxu0 %v158
  %v366 = vpop.f32.mrf.mxu0
  %v367 = vadd.f32 %v88, %v366
  %368 = vmatmul.f32.gmra.mxu0 %v161
  %v369 = vpop.f32.mrf.mxu0
  %v370 = vadd.f32 %v88, %v369
  %371 = vmatmul.f32.gmra.mxu0 %v164
  %v372 = vpop.f32.mrf.mxu0
  %v373 = vadd.f32 %v88, %v372
  %374 = vmatmul.f32.gmra.mxu0 %v167
  %v375 = vpop.f32.mrf.mxu0
  %v376 = vadd.f32 %v88, %v375
  %377 = vmatmul.f32.gmra.mxu0 %v170
  %v378 = vpop.f32.mrf.mxu0
  %v379 = vadd.f32 %v88, %v378
  %380 = vmatmul.f32.gmra.mxu0 %v173
  %v381 = vpop.f32.mrf.mxu0
  %v382 = vadd.f32 %v88, %v381
  %383 = vmatmul.f32.gmra.mxu0 %v176
  %v384 = vpop.f32.mrf.mxu0
  %v385 = vadd.f32 %v88, %v384
  %386 = vmatmul.f32.gmra.mxu0 %v179
  %v387 = vpop.f32.mrf.mxu0
  %v388 = vadd.f32 %v88, %v387
  %389 = vmatmul.f32.gmra.mxu0 %v182
  %v390 = vpop.f32.mrf.mxu0
  %v391 = vadd.f32 %v88, %v390
  %392 = vmatmul.f32.gmra.mxu0 %v185
  %v393 = vpop.f32.mrf.mxu0
  %v394 = vadd.f32 %v88, %v393
  %395 = vmatmul.f32.gmra.mxu0 %v188
  %v396 = vpop.f32.mrf.mxu0
  %v397 = vadd.f32 %v88, %v396
  %398 = vmatmul.f32.gmra.mxu0 %v191
  %v399 = vpop.f32.mrf.mxu0
  %v400 = vadd.f32 %v88, %v399
  %401 = vmatmul.f32.gmra.mxu0 %v194
  %v402 = vpop.f32.mrf.mxu0
  %v403 = vadd.f32 %v88, %v402
  %404 = vmatmul.f32.gmra.mxu0 %v197
  %v405 = vpop.f32.mrf.mxu0
  %v406 = vadd.f32 %v88, %v405
  %407 = vmatmul.f32.gmra.mxu0 %v200
  %v408 = vpop.f32.mrf.mxu0
  %v409 = vadd.f32 %v88, %v408
  %410 = vmatmul.f32.gmra.mxu0 %v203
  %v411 = vpop.f32.mrf.mxu0
  %v412 = vadd.f32 %v88, %v411
  %413 = vmatmul.f32.gmra.mxu0 %v206
  %v414 = vpop.f32.mrf.mxu0
  %v415 = vadd.f32 %v88, %v414
  %416 = vmatmul.f32.gmra.mxu0 %v209
  %v417 = vpop.f32.mrf.mxu0
  %v418 = vadd.f32 %v88, %v417
  %419 = vmatmul.f32.gmra.mxu0 %v212
  %v420 = vpop.f32.mrf.mxu0
  %v421 = vadd.f32 %v88, %v420
  %422 = vmatmul.f32.gmra.mxu0 %v215
  %v423 = vpop.f32.mrf.mxu0
  %v424 = vadd.f32 %v88, %v423
  %425 = vmatmul.f32.gmra.mxu0 %v218
  %v426 = vpop.f32.mrf.mxu0
  %v427 = vadd.f32 %v88, %v426
  %428 = vmatmul.f32.gmra.mxu0 %v221
  %v429 = vpop.f32.mrf.mxu0
  %v430 = vadd.f32 %v88, %v429
  %431 = vmatmul.f32.gmra.mxu0 %v224
  %v432 = vpop.f32.mrf.mxu0
  %v433 = vadd.f32 %v88, %v432
  %434 = vmatmul.f32.gmra.mxu0 %v227
  %v435 = vpop.f32.mrf.mxu0
  %v436 = vadd.f32 %v88, %v435
  %437 = vmatmul.f32.gmra.mxu0 %v230
  %v438 = vpop.f32.mrf.mxu0
  %v439 = vadd.f32 %v88, %v438
  %440 = vmatmul.f32.gmra.mxu0 %v233
  %v441 = vpop.f32.mrf.mxu0
  %v442 = vadd.f32 %v88, %v441
  %443 = vmatmul.f32.gmra.mxu0 %v236
  %v444 = vpop.f32.mrf.mxu0
  %v445 = vadd.f32 %v88, %v444
  %446 = vmatmul.f32.gmra.mxu0 %v239
  %v447 = vpop.f32.mrf.mxu0
  %v448 = vadd.f32 %v88, %v447
  %449 = vmatmul.f32.gmra.mxu0 %v242
  %v450 = vpop.f32.mrf.mxu0
  %v451 = vadd.f32 %v88, %v450
  %452 = vmatmul.f32.gmra.mxu0 %v245
  %v453 = vpop.f32.mrf.mxu0
  %v454 = vadd.f32 %v88, %v453
  %455 = vmatmul.f32.gmra.mxu0 %v248
  %v456 = vpop.f32.mrf.mxu0
  %v457 = vadd.f32 %v88, %v456
  %458 = vmatmul.f32.gmra.mxu0 %v251
  %v459 = vpop.f32.mrf.mxu0
  %v460 = vadd.f32 %v88, %v459
  %461 = vmatmul.f32.gmra.mxu0 %v254
  %v462 = vpop.f32.mrf.mxu0
  %v463 = vadd.f32 %v88, %v462
  %464 = vmatmul.f32.gmra.mxu0 %v257
  %v465 = vpop.f32.mrf.mxu0
  %v466 = vadd.f32 %v88, %v465
  %467 = vmatmul.f32.gmra.mxu0 %v260
  %v468 = vpop.f32.mrf.mxu0
  %v469 = vadd.f32 %v88, %v468
  %470 = vmatmul.f32.gmra.mxu0 %v263
  %v471 = vpop.f32.mrf.mxu0
  %v472 = vadd.f32 %v88, %v471
  %473 = vmatmul.f32.gmra.mxu0 %v266
  %v474 = vpop.f32.mrf.mxu0
  %v475 = vadd.f32 %v88, %v474
  %476 = vmatmul.f32.gmra.mxu0 %v269
  %v477 = vpop.f32.mrf.mxu0
  %v478 = vadd.f32 %v88, %v477
  %479 = vmatmul.f32.gmra.mxu0 %v272
  %v480 = vpop.f32.mrf.mxu0
  %v481 = vadd.f32 %v88, %v480
  %482 = vmatmul.f32.gmra.mxu0 %v275
  %v483 = vpop.f32.mrf.mxu0
  %v484 = vadd.f32 %v88, %v483
  %485 = vmatmul.f32.gmra.mxu0 %v278
  %v486 = vpop.f32.mrf.mxu0
  %v487 = vadd.f32 %v88, %v486
  %488 = vmatmul.f32.gmra.mxu0 %v281
  %v489 = vpop.f32.mrf.mxu0
  %v490 = vadd.f32 %v88, %v489
  %491 = vdwg.mxu0
  %v492 = vtanh.pop %v301
  %v493 = vtanh.pop %v304
  %v494 = vtanh.pop %v307
  %v495 = vtanh.pop %v310
  %v496 = vtanh.pop %v313
  %v497 = vtanh.pop %v316
  %v498 = vtanh.pop %v319
  %v499 = vtanh.pop %v322
  %v500 = vtanh.pop %v325
  %v501 = vtanh.pop %v328
  %v502 = vtanh.pop %v331
  %v503 = vtanh.pop %v334
  %v504 = vtanh.pop %v337
  %v505 = vtanh.pop %v340
  %v506 = vtanh.pop %v343
  %v507 = vtanh.pop %v346
  %v508 = vtanh.pop %v349
  %v509 = vtanh.pop %v352
  %v510 = vtanh.pop %v355
  %v511 = vtanh.pop %v358
  %v512 = vtanh.pop %v361
  %v513 = vtanh.pop %v364
  %v514 = vtanh.pop %v367
  %v515 = vtanh.pop %v370
  %v516 = vtanh.pop %v373
  %v517 = vtanh.pop %v376
  %v518 = vtanh.pop %v379
  %v519 = vtanh.pop %v382
  %v520 = vtanh.pop %v385
  %v521 = vtanh.pop %v388
  %v522 = vtanh.pop %v391
  %v523 = vtanh.pop %v394
  %v524 = vtanh.pop %v397
  %v525 = vtanh.pop %v400
  %v526 = vtanh.pop %v403
  %v527 = vtanh.pop %v406
  %v528 = vtanh.pop %v409
  %v529 = vtanh.pop %v412
  %v530 = vtanh.pop %v415
  %v531 = vtanh.pop %v418
  %v532 = vtanh.pop %v421
  %v533 = vtanh.pop %v424
  %v534 = vtanh.pop %v427
  %v535 = vtanh.pop %v430
  %v536 = vtanh.pop %v433
  %v537 = vtanh.pop %v436
  %v538 = vtanh.pop %v439
  %v539 = vtanh.pop %v442
  %v540 = vtanh.pop %v445
  %v541 = vtanh.pop %v448
  %v542 = vtanh.pop %v451
  %v543 = vtanh.pop %v454
  %v544 = vtanh.pop %v457
  %v545 = vtanh.pop %v460
  %v546 = vtanh.pop %v463
  %v547 = vtanh.pop %v466
  %v548 = vtanh.pop %v469
  %v549 = vtanh.pop %v472
  %v550 = vtanh.pop %v475
  %v551 = vtanh.pop %v478
  %v552 = vtanh.pop %v481
  %v553 = vtanh.pop %v484
  %v554 = vtanh.pop %v487
  %v555 = vtanh.pop %v490
  %v556 = vld [vmem:[%s3] sm:$0xff]
  %v557 = vld [vmem:[%s3 + $0x8] sm:$0xff]
  %v558 = vld [vmem:[%s3 + $0x10] sm:$0xff]
  %v559 = vld [vmem:[%s3 + $0x18] sm:$0xff]
  %v560 = vld [vmem:[%s3 + $0x20] sm:$0xff]
  %v561 = vld [vmem:[%s3 + $0x28] sm:$0xff]
  %v562 = vld [vmem:[%s3 + $0x30] sm:$0xff]
  %v563 = vld [vmem:[%s3 + $0x38] sm:$0xff]
  %v564 = vld [vmem:[%s3 + $0x40] sm:$0xff]
  %v565 = vld [vmem:[%s3 + $0x48] sm:$0xff]
  %v566 = vld [vmem:[%s3 + $0x50] sm:$0xff]
  %v567 = vld [vmem:[%s3 + $0x58] sm:$0xff]
  %v568 = vld [vmem:[%s3 + $0x60] sm:$0xff]
  %v569 = vld [vmem:[%s3 + $0x68] sm:$0xff]
  %v570 = vld [vmem:[%s3 + $0x70] sm:$0xff]
  %v571 = vld [vmem:[%s3 + $0x78] sm:$0xff]
  %v572 = vld [vmem:[%s4] sm:$0x1]
  %v574 = vperm.slane %v572, 0
  %576 = vmatpush.msra.mxu0 %v571
  %577 = vmatpush.msra.mxu0 %v570
  %578 = vmatpush.msra.mxu0 %v569
  %579 = vmatpush.msra.mxu0 %v568
  %580 = vmatpush.msra.mxu0 %v567
  %581 = vmatpush.msra.mxu0 %v566
  %582 = vmatpush.msra.mxu0 %v565
  %583 = vmatpush.msra.mxu0 %v564
  %584 = vmatpush.msra.mxu0 %v563
  %585 = vmatpush.msra.mxu0 %v562
  %586 = vmatpush.msra.mxu0 %v561
  %587 = vmatpush.msra.mxu0 %v560
  %588 = vmatpush.msra.mxu0 %v559
  %589 = vmatpush.msra.mxu0 %v558
  %590 = vmatpush.msra.mxu0 %v557
  %591 = vmatpush.msra.mxu0 %v556
  %592 = vmatmul.f32.gmra.mxu0 %v492
  %v593 = vpop.f32.mrf.mxu0
  %v594 = vadd.f32 %v574, %v593
  %595 = vmatmul.f32.gmra.mxu0 %v493
  %v596 = vpop.f32.mrf.mxu0
  %v597 = vadd.f32 %v574, %v596
  %598 = vmatmul.f32.gmra.mxu0 %v494
  %v599 = vpop.f32.mrf.mxu0
  %v600 = vadd.f32 %v574, %v599
  %601 = vmatmul.f32.gmra.mxu0 %v495
  %v602 = vpop.f32.mrf.mxu0
  %v603 = vadd.f32 %v574, %v602
  %604 = vmatmul.f32.gmra.mxu0 %v496
  %v605 = vpop.f32.mrf.mxu0
  %v606 = vadd.f32 %v574, %v605
  %607 = vmatmul.f32.gmra.mxu0 %v497
  %v608 = vpop.f32.mrf.mxu0
  %v609 = vadd.f32 %v574, %v608
  %610 = vmatmul.f32.gmra.mxu0 %v498
  %v611 = vpop.f32.mrf.mxu0
  %v612 = vadd.f32 %v574, %v611
  %613 = vmatmul.f32.gmra.mxu0 %v499
  %v614 = vpop.f32.mrf.mxu0
  %v615 = vadd.f32 %v574, %v614
  %616 = vmatmul.f32.gmra.mxu0 %v500
  %v617 = vpop.f32.mrf.mxu0
  %v618 = vadd.f32 %v574, %v617
  %619 = vmatmul.f32.gmra.mxu0 %v501
  %v620 = vpop.f32.mrf.mxu0
  %v621 = vadd.f32 %v574, %v620
  %622 = vmatmul.f32.gmra.mxu0 %v502
  %v623 = vpop.f32.mrf.mxu0
  %v624 = vadd.f32 %v574, %v623
  %625 = vmatmul.f32.gmra.mxu0 %v503
  %v626 = vpop.f32.mrf.mxu0
  %v627 = vadd.f32 %v574, %v626
  %628 = vmatmul.f32.gmra.mxu0 %v504
  %v629 = vpop.f32.mrf.mxu0
  %v630 = vadd.f32 %v574, %v629
  %631 = vmatmul.f32.gmra.mxu0 %v505
  %v632 = vpop.f32.mrf.mxu0
  %v633 = vadd.f32 %v574, %v632
  %634 = vmatmul.f32.gmra.mxu0 %v506
  %v635 = vpop.f32.mrf.mxu0
  %v636 = vadd.f32 %v574, %v635
  %637 = vmatmul.f32.gmra.mxu0 %v507
  %v638 = vpop.f32.mrf.mxu0
  %v639 = vadd.f32 %v574, %v638
  %640 = vmatmul.f32.gmra.mxu0 %v508
  %v641 = vpop.f32.mrf.mxu0
  %v642 = vadd.f32 %v574, %v641
  %643 = vmatmul.f32.gmra.mxu0 %v509
  %v644 = vpop.f32.mrf.mxu0
  %v645 = vadd.f32 %v574, %v644
  %646 = vmatmul.f32.gmra.mxu0 %v510
  %v647 = vpop.f32.mrf.mxu0
  %v648 = vadd.f32 %v574, %v647
  %649 = vmatmul.f32.gmra.mxu0 %v511
  %v650 = vpop.f32.mrf.mxu0
  %v651 = vadd.f32 %v574, %v650
  %652 = vmatmul.f32.gmra.mxu0 %v512
  %v653 = vpop.f32.mrf.mxu0
  %v654 = vadd.f32 %v574, %v653
  %655 = vmatmul.f32.gmra.mxu0 %v513
  %v656 = vpop.f32.mrf.mxu0
  %v657 = vadd.f32 %v574, %v656
  %658 = vmatmul.f32.gmra.mxu0 %v514
  %v659 = vpop.f32.mrf.mxu0
  %v660 = vadd.f32 %v574, %v659
  %661 = vmatmul.f32.gmra.mxu0 %v515
  %v662 = vpop.f32.mrf.mxu0
  %v663 = vadd.f32 %v574, %v662
  %664 = vmatmul.f32.gmra.mxu0 %v516
  %v665 = vpop.f32.mrf.mxu0
  %v666 = vadd.f32 %v574, %v665
  %667 = vmatmul.f32.gmra.mxu0 %v517
  %v668 = vpop.f32.mrf.mxu0
  %v669 = vadd.f32 %v574, %v668
  %670 = vmatmul.f32.gmra.mxu0 %v518
  %v671 = vpop.f32.mrf.mxu0
  %v672 = vadd.f32 %v574, %v671
  %673 = vmatmul.f32.gmra.mxu0 %v519
  %v674 = vpop.f32.mrf.mxu0
  %v675 = vadd.f32 %v574, %v674
  %676 = vmatmul.f32.gmra.mxu0 %v520
  %v677 = vpop.f32.mrf.mxu0
  %v678 = vadd.f32 %v574, %v677
  %679 = vmatmul.f32.gmra.mxu0 %v521
  %v680 = vpop.f32.mrf.mxu0
  %v681 = vadd.f32 %v574, %v680
  %682 = vmatmul.f32.gmra.mxu0 %v522
  %v683 = vpop.f32.mrf.mxu0
  %v684 = vadd.f32 %v574, %v683
  %685 = vmatmul.f32.gmra.mxu0 %v523
  %v686 = vpop.f32.mrf.mxu0
  %v687 = vadd.f32 %v574, %v686
  %688 = vmatmul.f32.gmra.mxu0 %v524
  %v689 = vpop.f32.mrf.mxu0
  %v690 = vadd.f32 %v574, %v689
  %691 = vmatmul.f32.gmra.mxu0 %v525
  %v692 = vpop.f32.mrf.mxu0
  %v693 = vadd.f32 %v574, %v692
  %694 = vmatmul.f32.gmra.mxu0 %v526
  %v695 = vpop.f32.mrf.mxu0
  %v696 = vadd.f32 %v574, %v695
  %697 = vmatmul.f32.gmra.mxu0 %v527
  %v698 = vpop.f32.mrf.mxu0
  %v699 = vadd.f32 %v574, %v698
  %700 = vmatmul.f32.gmra.mxu0 %v528
  %v701 = vpop.f32.mrf.mxu0
  %v702 = vadd.f32 %v574, %v701
  %703 = vmatmul.f32.gmra.mxu0 %v529
  %v704 = vpop.f32.mrf.mxu0
  %v705 = vadd.f32 %v574, %v704
  %706 = vmatmul.f32.gmra.mxu0 %v530
  %v707 = vpop.f32.mrf.mxu0
  %v708 = vadd.f32 %v574, %v707
  %709 = vmatmul.f32.gmra.mxu0 %v531
  %v710 = vpop.f32.mrf.mxu0
  %v711 = vadd.f32 %v574, %v710
  %712 = vmatmul.f32.gmra.mxu0 %v532
  %v713 = vpop.f32.mrf.mxu0
  %v714 = vadd.f32 %v574, %v713
  %715 = vmatmul.f32.gmra.mxu0 %v533
  %v716 = vpop.f32.mrf.mxu0
  %v717 = vadd.f32 %v574, %v716
  %718 = vmatmul.f32.gmra.mxu0 %v534
  %v719 = vpop.f32.mrf.mxu0
  %v720 = vadd.f32 %v574, %v719
  %721 = vmatmul.f32.gmra.mxu0 %v535
  %v722 = vpop.f32.mrf.mxu0
  %v723 = vadd.f32 %v574, %v722
  %724 = vmatmul.f32.gmra.mxu0 %v536
  %v725 = vpop.f32.mrf.mxu0
  %v726 = vadd.f32 %v574, %v725
  %727 = vmatmul.f32.gmra.mxu0 %v537
  %v728 = vpop.f32.mrf.mxu0
  %v729 = vadd.f32 %v574, %v728
  %730 = vmatmul.f32.gmra.mxu0 %v538
  %v731 = vpop.f32.mrf.mxu0
  %v732 = vadd.f32 %v574, %v731
  %733 = vmatmul.f32.gmra.mxu0 %v539
  %v734 = vpop.f32.mrf.mxu0
  %v735 = vadd.f32 %v574, %v734
  %736 = vmatmul.f32.gmra.mxu0 %v540
  %v737 = vpop.f32.mrf.mxu0
  %v738 = vadd.f32 %v574, %v737
  %739 = vmatmul.f32.gmra.mxu0 %v541
  %v740 = vpop.f32.mrf.mxu0
  %v741 = vadd.f32 %v574, %v740
  %742 = vmatmul.f32.gmra.mxu0 %v542
  %v743 = vpop.f32.mrf.mxu0
  %v744 = vadd.f32 %v574, %v743
  %745 = vmatmul.f32.gmra.mxu0 %v543
  %v746 = vpop.f32.mrf.mxu0
  %v747 = vadd.f32 %v574, %v746
  %748 = vmatmul.f32.gmra.mxu0 %v544
  %v749 = vpop.f32.mrf.mxu0
  %v750 = vadd.f32 %v574, %v749
  %751 = vmatmul.f32.gmra.mxu0 %v545
  %v752 = vpop.f32.mrf.mxu0
  %v753 = vadd.f32 %v574, %v752
  %754 = vmatmul.f32.gmra.mxu0 %v546
  %v755 = vpop.f32.mrf.mxu0
  %v756 = vadd.f32 %v574, %v755
  %757 = vmatmul.f32.gmra.mxu0 %v547
  %v758 = vpop.f32.mrf.mxu0
  %v759 = vadd.f32 %v574, %v758
  %760 = vmatmul.f32.gmra.mxu0 %v548
  %v761 = vpop.f32.mrf.mxu0
  %v762 = vadd.f32 %v574, %v761
  %763 = vmatmul.f32.gmra.mxu0 %v549
  %v764 = vpop.f32.mrf.mxu0
  %v765 = vadd.f32 %v574, %v764
  %766 = vmatmul.f32.gmra.mxu0 %v550
  %v767 = vpop.f32.mrf.mxu0
  %v768 = vadd.f32 %v574, %v767
  %769 = vmatmul.f32.gmra.mxu0 %v551
  %v770 = vpop.f32.mrf.mxu0
  %v771 = vadd.f32 %v574, %v770
  %772 = vmatmul.f32.gmra.mxu0 %v552
  %v773 = vpop.f32.mrf.mxu0
  %v774 = vadd.f32 %v574, %v773
  %775 = vmatmul.f32.gmra.mxu0 %v553
  %v776 = vpop.f32.mrf.mxu0
  %v777 = vadd.f32 %v574, %v776
  %778 = vmatmul.f32.gmra.mxu0 %v554
  %v779 = vpop.f32.mrf.mxu0
  %v780 = vadd.f32 %v574, %v779
  %781 = vmatmul.f32.gmra.mxu0 %v555
  %v782 = vpop.f32.mrf.mxu0
  %v783 = vadd.f32 %v574, %v782
  %784 = vdwg.mxu0
  %785 = vst [vmem:[%s5] sm:$0xff] %v594
  %786 = vst [vmem:[%s5 + $0x8] sm:$0xff] %v597
  %787 = vst [vmem:[%s5 + $0x10] sm:$0xff] %v600
  %788 = vst [vmem:[%s5 + $0x18] sm:$0xff] %v603
  %789 = vst [vmem:[%s5 + $0x20] sm:$0xff] %v606
  %790 = vst [vmem:[%s5 + $0x28] sm:$0xff] %v609
  %791 = vst [vmem:[%s5 + $0x30] sm:$0xff] %v612
  %792 = vst [vmem:[%s5 + $0x38] sm:$0xff] %v615
  %793 = vst [vmem:[%s5 + $0x40] sm:$0xff] %v618
  %794 = vst [vmem:[%s5 + $0x48] sm:$0xff] %v621
  %795 = vst [vmem:[%s5 + $0x50] sm:$0xff] %v624
  %796 = vst [vmem:[%s5 + $0x58] sm:$0xff] %v627
  %797 = vst [vmem:[%s5 + $0x60] sm:$0xff] %v630
  %798 = vst [vmem:[%s5 + $0x68] sm:$0xff] %v633
  %799 = vst [vmem:[%s5 + $0x70] sm:$0xff] %v636
  %800 = vst [vmem:[%s5 + $0x78] sm:$0xff] %v639
  %801 = vst [vmem:[%s5 + $0x80] sm:$0xff] %v642
  %802 = vst [vmem:[%s5 + $0x88] sm:$0xff] %v645
  %803 = vst [vmem:[%s5 + $0x90] sm:$0xff] %v648
  %804 = vst [vmem:[%s5 + $0x98] sm:$0xff] %v651
  %805 = vst [vmem:[%s5 + $0xa0] sm:$0xff] %v654
  %806 = vst [vmem:[%s5 + $0xa8] sm:$0xff] %v657
  %807 = vst [vmem:[%s5 + $0xb0] sm:$0xff] %v660
  %808 = vst [vmem:[%s5 + $0xb8] sm:$0xff] %v663
  %809 = vst [vmem:[%s5 + $0xc0] sm:$0xff] %v666
  %810 = vst [vmem:[%s5 + $0xc8] sm:$0xff] %v669
  %811 = vst [vmem:[%s5 + $0xd0] sm:$0xff] %v672
  %812 = vst [vmem:[%s5 + $0xd8] sm:$0xff] %v675
  %813 = vst [vmem:[%s5 + $0xe0] sm:$0xff] %v678
  %814 = vst [vmem:[%s5 + $0xe8] sm:$0xff] %v681
  %815 = vst [vmem:[%s5 + $0xf0] sm:$0xff] %v684
  %816 = vst [vmem:[%s5 + $0xf8] sm:$0xff] %v687
  %817 = vst [vmem:[%s5 + $0x100] sm:$0xff] %v690
  %818 = vst [vmem:[%s5 + $0x108] sm:$0xff] %v693
  %819 = vst [vmem:[%s5 + $0x110] sm:$0xff] %v696
  %820 = vst [vmem:[%s5 + $0x118] sm:$0xff] %v699
  %821 = vst [vmem:[%s5 + $0x120] sm:$0xff] %v702
  %822 = vst [vmem:[%s5 + $0x128] sm:$0xff] %v705
  %823 = vst [vmem:[%s5 + $0x130] sm:$0xff] %v708
  %824 = vst [vmem:[%s5 + $0x138] sm:$0xff] %v711
  %825 = vst [vmem:[%s5 + $0x140] sm:$0xff] %v714
  %826 = vst [vmem:[%s5 + $0x148] sm:$0xff] %v717
  %827 = vst [vmem:[%s5 + $0x150] sm:$0xff] %v720
  %828 = vst [vmem:[%s5 + $0x158] sm:$0xff] %v723
  %829 = vst [vmem:[%s5 + $0x160] sm:$0xff] %v726
  %830 = vst [vmem:[%s5 + $0x168] sm:$0xff] %v729
  %831 = vst [vmem:[%s5 + $0x170] sm:$0xff] %v732
  %832 = vst [vmem:[%s5 + $0x178] sm:$0xff] %v735
  %833 = vst [vmem:[%s5 + $0x180] sm:$0xff] %v738
  %834 = vst [vmem:[%s5 + $0x188] sm:$0xff] %v741
  %835 = vst [vmem:[%s5 + $0x190] sm:$0xff] %v744
  %836 = vst [vmem:[%s5 + $0x198] sm:$0xff] %v747
  %837 = vst [vmem:[%s5 + $0x1a0] sm:$0xff] %v750
  %838 = vst [vmem:[%s5 + $0x1a8] sm:$0xff] %v753
  %839 = vst [vmem:[%s5 + $0x1b0] sm:$0xff] %v756
  %840 = vst [vmem:[%s5 + $0x1b8] sm:$0xff] %v759
  %841 = vst [vmem:[%s5 + $0x1c0] sm:$0xff] %v762
  %842 = vst [vmem:[%s5 + $0x1c8] sm:$0xff] %v765
  %843 = vst [vmem:[%s5 + $0x1d0] sm:$0xff] %v768
  %844 = vst [vmem:[%s5 + $0x1d8] sm:$0xff] %v771
  %845 = vst [vmem:[%s5 + $0x1e0] sm:$0xff] %v774
  %846 = vst [vmem:[%s5 + $0x1e8] sm:$0xff] %v777
  %847 = vst [vmem:[%s5 + $0x1f0] sm:$0xff] %v780
  %848 = vst [vmem:[%s5 + $0x1f8] sm:$0xff] %v783
  // Predicated region
  $region22: #{actor_forward.1} parent=0 // pred_check
    _
  $region23: #{actor_forward.1} parent=0 // pred_check_branch
    %850 = sbr.rel (0) target = $region25
  $region24: #{actor_forward.1} parent=0 // pred_region
    _
  $region25: #{actor_forward.1} parent=0 // pred_fallthru
    _
  // Predicated region
  $region26: #{actor_forward.1} parent=0 // pred_check
    _
  $region27: #{actor_forward.1} parent=0 // pred_check_branch
    %852 = sbr.rel (0) target = $region29
  $region28: #{actor_forward.1} parent=0 // pred_region
    _
  $region29: #{actor_forward.1} parent=0 // pred_fallthru
    _

</llo_original>
